<compile_context>
chip_gen: v6e
topology: v6e:2x2x1
jax: 0.10.0
libtpu: 0.0.40
codegen_flags: <defaults>
</compile_context>

<pallas_src>
import math

import jax
import jax.numpy as jnp
from jax.experimental import pallas as pl
from jax.experimental.pallas import tpu as pltpu

_LANES = 128
_ACC_ROWS = 8                   # fold every tile to one (8,128) vreg before accumulating
_MAX_TILE_ROWS = 4096           # 4096 x 128 f32 = 2 MiB per input block


def _row_align(*dtypes):
    """Sublane packing multiple for the narrowest streamed dtype (f32:8, bf16:16, i8:32)."""
    align = 8
    for dt in dtypes:
        isz = jnp.dtype(dt).itemsize
        if isz == 2:
            align = max(align, 16)
        elif isz <= 1:
            align = max(align, 32)
    return align


def _make_kernel(tile_rows, acc_rows, n_valid, chunks_per_split, mask_tail):
    """Build the partial-sum kernel for fixed (static) tiling parameters."""
    fold = tile_rows // acc_rows

    def kernel(x_ref, y_ref, o_ref, bce_acc, den_acc, int_acc):
        k = pl.program_id(2)

        @pl.when(k == 0)
        def _init():
            bce_acc[...] = jnp.zeros_like(bce_acc)
            den_acc[...] = jnp.zeros_like(den_acc)
            int_acc[...] = jnp.zeros_like(int_acc)

        # Stream native dtypes; upcast to f32 on the VPU.
        x = x_ref[...].astype(jnp.float32)
        y = y_ref[...].astype(jnp.float32)

        # One shared exp(-|x|) feeds both the stable-BCE log term and the sigmoid.
        e = jnp.exp(-jnp.abs(x))
        log_term = jnp.log1p(e)
        d = 1.0 + e
        # EUP approx reciprocal + one Newton step (~f32 accurate), keeps the exact
        # divide's long-latency work off the already busy EUP path.
        r = pl.reciprocal(d, approx=True)
        inv = r * (2.0 - d * r)
        probs = jnp.where(x >= 0.0, inv, e * inv)

        # Numerically stable BCE-with-logits: max(x,0) - x*y + log1p(exp(-|x|)).
        bce = jnp.maximum(x, 0.0) - x * y + log_term
        den = probs + y          # fused Dice denominator: sum(probs) + sum(targets)
        inter = probs * y

        if mask_tail:
            # Ragged tail (lane pad and/or chunk overrun): zero invalid contributions.
            chunk = pl.program_id(1) * chunks_per_split + k
            row = (jax.lax.broadcasted_iota(jnp.int32, (tile_rows, _LANES), 0)
                   + chunk * tile_rows)
            lane = jax.lax.broadcasted_iota(jnp.int32, (tile_rows, _LANES), 1)
            valid = row * _LANES + lane < n_valid
            bce = jnp.where(valid, bce, 0.0)
            den = jnp.where(valid, den, 0.0)
            inter = jnp.where(valid, inter, 0.0)

        def _fold(v):
            # (tile_rows,128) -> (acc_rows,128): vreg-aligned groups, VALU-only adds.
            if fold == 1:
                return v
            return v.reshape(fold, acc_rows, _LANES).sum(axis=0)

        bce_acc[...] += _fold(bce)
        den_acc[...] += _fold(den)
        int_acc[...] += _fold(inter)

        @pl.when(k == pl.num_programs(2) - 1)
        def _epilogue():
            # Aligned full-tile stores (no sub-8-sublane fragment stores).
            o_ref[0] = bce_acc[...]
            o_ref[1] = den_acc[...]
            o_ref[2] = int_acc[...]

    return kernel


def bce_dice_loss(inputs, targets, *, max_tile_rows=_MAX_TILE_ROWS):
    """inputs (logits), targets: (B, C, H, W) (any trailing shape). Returns scalar f32 loss."""
    B = inputs.shape[0]
    N = math.prod(inputs.shape[1:])

    x = inputs.reshape(B, N)
    y = targets.reshape(B, N)
    # Stream native dtypes (bf16 logits, int8/uint8 targets, ...); only bool is widened.
    if x.dtype == jnp.bool_:
        x = x.astype(jnp.int8)
    if y.dtype == jnp.bool_:
        y = y.astype(jnp.int8)

    rows = pl.cdiv(N, _LANES)
    lane_pad = rows * _LANES - N
    if lane_pad:
        # Only pad to the next 128-lane multiple (<=127 elems / batch row); the tail is
        # masked in-kernel, so the pad value is irrelevant.
        # TODO(synk): block the flat (B, N) layout directly to drop even this copy.
        x = jnp.pad(x, ((0, 0), (0, lane_pad)))
        y = jnp.pad(y, ((0, 0), (0, lane_pad)))
    x = x.reshape(B, rows, _LANES)
    y = y.reshape(B, rows, _LANES)

    # Tile rows: multiple of the sublane packing of the narrowest dtype, or the full
    # row extent when a single chunk suffices.
    align = _row_align(x.dtype, y.dtype)
    tile_cap = max(align, (max_tile_rows // align) * align)
    if rows <= tile_cap:
        tile_rows, num_chunks = rows, 1
    else:
        tile_rows, num_chunks = tile_cap, pl.cdiv(rows, tile_cap)
    acc_rows = _ACC_ROWS if tile_rows % _ACC_ROWS == 0 else tile_rows

    # v7x megacore: if B is odd, split each batch row's chunk range in two so the
    # parallel grid work count is even and both TensorCores stay busy.
    n_split = 2 if (B % 2 == 1 and num_chunks % 2 == 0 and num_chunks >= 2) else 1
    chunks_per_split = num_chunks // n_split

    mask_tail = (lane_pad != 0) or (num_chunks * tile_rows != rows)

    kernel = _make_kernel(tile_rows, acc_rows, N, chunks_per_split, mask_tail)

    in_spec = pl.BlockSpec((None, tile_rows, _LANES),
                           lambda b, s, k: (b, s * chunks_per_split + k, 0))

    partial = pl.pallas_call(
        kernel,
        out_shape=jax.ShapeDtypeStruct((B, n_split, 3, acc_rows, _LANES), jnp.float32),
        grid_spec=pltpu.PrefetchScalarGridSpec(
            num_scalar_prefetch=0,
            grid=(B, n_split, chunks_per_split),
            in_specs=[in_spec, in_spec],
            out_specs=pl.BlockSpec((None, None, 3, acc_rows, _LANES),
                                   lambda b, s, k: (b, s, 0, 0, 0)),
            scratch_shapes=[pltpu.VMEM((acc_rows, _LANES), jnp.float32)
                            for _ in range(3)],
        ),
        compiler_params=pltpu.CompilerParams(
            dimension_semantics=("parallel", "parallel", "arbitrary"),
            vmem_limit_bytes=32 * 1024 * 1024,
        ),
    )(x, y)

    # Tiny final reduce + scalar combine in plain JAX.
    sums = jnp.sum(partial, axis=(1, 3, 4))                   # (B, 3)
    bce_sum, den_sum, int_sum = sums[:, 0], sums[:, 1], sums[:, 2]

    smooth = 1e-5
    bce_loss = jnp.sum(bce_sum) / jnp.float32(B * N)          # mean over real elements only
    dice = (2.0 * int_sum + smooth) / (den_sum + smooth)
    return bce_loss + (1.0 - jnp.mean(dice))


def _reference(inputs, targets):
    x = inputs.astype(jnp.float32)
    y = targets.astype(jnp.float32)
    bce = jnp.mean(jnp.maximum(x, 0.0) - x * y + jnp.log1p(jnp.exp(-jnp.abs(x))))
    B = x.shape[0]
    p = jax.nn.sigmoid(x).reshape(B, -1)
    t = y.reshape(B, -1)
    smooth = 1e-5
    inter = jnp.sum(p * t, axis=1)
    dice = (2.0 * inter + smooth) / (jnp.sum(p, axis=1) + jnp.sum(t, axis=1) + smooth)
    return bce + (1.0 - jnp.mean(dice))


if __name__ == "__main__":
    key = jax.random.PRNGKey(0)
    k1, k2, k3, k4, k5, k6, k7, k8 = jax.random.split(key, 8)

    # 1) Primary module shape: single chunk per batch row, no masking, f32 targets.
    B, C, H, W = 2, 4, 16, 16
    logits = jax.random.normal(k1, (B, C, H, W), dtype=jnp.float32)
    targets = (jax.random.uniform(k2, (B, C, H, W)) > 0.5).astype(jnp.float32)
    out = jax.block_until_ready(bce_dice_loss(logits, targets))
    ref = jax.block_until_ready(_reference(logits, targets))
    assert jnp.allclose(out, ref, atol=1e-5, rtol=1e-5), (out, ref)

    # 2) Ragged N + forced multi-chunk reduction: exercises in-kernel tail masking,
    #    accumulator init/epilogue and partial trailing blocks.
    logits2 = jax.random.normal(k3, (2, 3, 25, 33), dtype=jnp.float32)
    targets2 = (jax.random.uniform(k4, (2, 3, 25, 33)) > 0.5).astype(jnp.float32)
    out2 = jax.block_until_ready(bce_dice_loss(logits2, targets2, max_tile_rows=8))
    ref2 = jax.block_until_ready(_reference(logits2, targets2))
    assert jnp.allclose(out2, ref2, atol=1e-5, rtol=1e-5), (out2, ref2)

    # 3) Native int8 targets (no wrapper cast) + in-register fold (32 rows -> 8).
    logits3 = jax.random.normal(k5, (2, 4, 32, 32), dtype=jnp.float32)
    targets3 = (jax.random.uniform(k6, (2, 4, 32, 32)) > 0.5).astype(jnp.int8)
    out3 = jax.block_until_ready(bce_dice_loss(logits3, targets3))
    ref3 = jax.block_until_ready(_reference(logits3, targets3.astype(jnp.float32)))
    assert jnp.allclose(out3, ref3, atol=1e-5, rtol=1e-5), (out3, ref3)

    # 4) B == 1 with an even chunk count: exercises the two-way split that keeps both
    #    v7x TensorCores busy on the parallel axes.
    logits4 = jax.random.normal(k7, (1, 4, 16, 32), dtype=jnp.float32)
    targets4 = (jax.random.uniform(k8, (1, 4, 16, 32)) > 0.5).astype(jnp.float32)
    out4 = jax.block_until_ready(bce_dice_loss(logits4, targets4, max_tile_rows=8))
    ref4 = jax.block_until_ready(_reference(logits4, targets4))
    assert jnp.allclose(out4, ref4, atol=1e-5, rtol=1e-5), (out4, ref4)

    print("KERNEL_OK")
</pallas_src>

<mosaic_0001>
module attributes {stable_mosaic.version = 11 : i64} {
  func.func @kernel(%arg0: i32, %arg1: i32, %arg2: i32, %arg3: memref<1x8x128xf32, #tpu.memory_space<vmem>>, %arg4: memref<1x8x128xf32, #tpu.memory_space<vmem>>, %arg5: memref<1x1x3x8x128xf32, #tpu.memory_space<vmem>>, %arg6: memref<8x128xf32, #tpu.memory_space<vmem>>, %arg7: memref<8x128xf32, #tpu.memory_space<vmem>>, %arg8: memref<8x128xf32, #tpu.memory_space<vmem>>) attributes {dimension_semantics = [#tpu.dimension_semantics<parallel>, #tpu.dimension_semantics<parallel>, #tpu.dimension_semantics<arbitrary>], iteration_bounds = array<i64: 2, 1, 1>, scalar_prefetch = 0 : i64, scratch_operands = 3 : i64, tpu.core_type = #tpu.core_type<tc>, window_params = [{transform_indices = @transform_0, window_bounds = array<i64: 1, 8, 128>}, {transform_indices = @transform_1, window_bounds = array<i64: 1, 8, 128>}, {transform_indices = @transform_2, window_bounds = array<i64: 1, 1, 3, 8, 128>}]} {
    %c0_i32 = arith.constant 0 : i32
    %0 = arith.cmpi eq, %arg2, %c0_i32 : i32
    %1 = arith.extui %0 : i1 to i32
    %c0_i32_0 = arith.constant 0 : i32
    %2 = arith.cmpi ne, %1, %c0_i32_0 : i32
    scf.if %2 {
      %cst_24 = arith.constant 0.000000e+00 : f32
      %42 = vector.broadcast %cst_24 : f32 to vector<8x128xf32>
      %c0_25 = arith.constant 0 : index
      %c0_26 = arith.constant 0 : index
      %43 = vector.load %arg6[%c0_25, %c0_26] : memref<8x128xf32, #tpu.memory_space<vmem>>, vector<8x128xf32>
      tpu.vector_store %arg6[%c0_25, %c0_26], %42 {strides = array<i32>} : memref<8x128xf32, #tpu.memory_space<vmem>>, vector<8x128xf32>,
      %cst_27 = arith.constant 0.000000e+00 : f32
      %44 = vector.broadcast %cst_27 : f32 to vector<8x128xf32>
      %c0_28 = arith.constant 0 : index
      %c0_29 = arith.constant 0 : index
      %45 = vector.load %arg7[%c0_28, %c0_29] : memref<8x128xf32, #tpu.memory_space<vmem>>, vector<8x128xf32>
      tpu.vector_store %arg7[%c0_28, %c0_29], %44 {strides = array<i32>} : memref<8x128xf32, #tpu.memory_space<vmem>>, vector<8x128xf32>,
      %cst_30 = arith.constant 0.000000e+00 : f32
      %46 = vector.broadcast %cst_30 : f32 to vector<8x128xf32>
      %c0_31 = arith.constant 0 : index
      %c0_32 = arith.constant 0 : index
      %47 = vector.load %arg8[%c0_31, %c0_32] : memref<8x128xf32, #tpu.memory_space<vmem>>, vector<8x128xf32>
      tpu.vector_store %arg8[%c0_31, %c0_32], %46 {strides = array<i32>} : memref<8x128xf32, #tpu.memory_space<vmem>>, vector<8x128xf32>,
    } else {
    }
    %c0 = arith.constant 0 : index
    %c0_1 = arith.constant 0 : index
    %c0_2 = arith.constant 0 : index
    %3 = vector.load %arg3[%c0, %c0_1, %c0_2] : memref<1x8x128xf32, #tpu.memory_space<vmem>>, vector<1x8x128xf32>
    %4 = vector.shape_cast %3 : vector<1x8x128xf32> to vector<8x128xf32>
    %c0_3 = arith.constant 0 : index
    %c0_4 = arith.constant 0 : index
    %c0_5 = arith.constant 0 : index
    %5 = vector.load %arg4[%c0_3, %c0_4, %c0_5] : memref<1x8x128xf32, #tpu.memory_space<vmem>>, vector<1x8x128xf32>
    %6 = vector.shape_cast %5 : vector<1x8x128xf32> to vector<8x128xf32>
    %7 = math.absf %4 : vector<8x128xf32>
    %cst = arith.constant 0.000000e+00 : f32
    %8 = vector.broadcast %cst : f32 to vector<8x128xf32>
    %9 = arith.subf %8, %7 : vector<8x128xf32>
    %10 = math.exp %9 : vector<8x128xf32>
    %11 = math.log1p %10 : vector<8x128xf32>
    %cst_6 = arith.constant 1.000000e+00 : f32
    %12 = vector.broadcast %cst_6 : f32 to vector<8x128xf32>
    %13 = arith.addf %12, %10 : vector<8x128xf32>
    %14 = tpu.reciprocal %13 {approx = true} : vector<8x128xf32> -> vector<8x128xf32>
    %15 = arith.mulf %13, %14 : vector<8x128xf32>
    %cst_7 = arith.constant 2.000000e+00 : f32
    %16 = vector.broadcast %cst_7 : f32 to vector<8x128xf32>
    %17 = arith.subf %16, %15 : vector<8x128xf32>
    %18 = arith.mulf %14, %17 : vector<8x128xf32>
    %cst_8 = arith.constant 0.000000e+00 : f32
    %19 = vector.broadcast %cst_8 : f32 to vector<8x128xf32>
    %20 = arith.cmpf oge, %4, %19 : vector<8x128xf32>
    %21 = arith.mulf %10, %18 : vector<8x128xf32>
    %22 = arith.select %20, %18, %21 : vector<8x128xi1>, vector<8x128xf32>
    %cst_9 = arith.constant 0.000000e+00 : f32
    %23 = vector.broadcast %cst_9 : f32 to vector<8x128xf32>
    %24 = arith.maximumf %4, %23 : vector<8x128xf32>
    %25 = arith.mulf %4, %6 : vector<8x128xf32>
    %26 = arith.subf %24, %25 : vector<8x128xf32>
    %27 = arith.addf %26, %11 : vector<8x128xf32>
    %28 = arith.addf %22, %6 : vector<8x128xf32>
    %29 = arith.mulf %22, %6 : vector<8x128xf32>
    %c0_10 = arith.constant 0 : index
    %c0_11 = arith.constant 0 : index
    %30 = vector.load %arg6[%c0_10, %c0_11] : memref<8x128xf32, #tpu.memory_space<vmem>>, vector<8x128xf32>
    %31 = arith.addf %30, %27 : vector<8x128xf32>
    %c0_12 = arith.constant 0 : index
    %c0_13 = arith.constant 0 : index
    %32 = vector.load %arg6[%c0_12, %c0_13] : memref<8x128xf32, #tpu.memory_space<vmem>>, vector<8x128xf32>
    tpu.vector_store %arg6[%c0_12, %c0_13], %31 {strides = array<i32>} : memref<8x128xf32, #tpu.memory_space<vmem>>, vector<8x128xf32>,
    %c0_14 = arith.constant 0 : index
    %c0_15 = arith.constant 0 : index
    %33 = vector.load %arg7[%c0_14, %c0_15] : memref<8x128xf32, #tpu.memory_space<vmem>>, vector<8x128xf32>
    %34 = arith.addf %33, %28 : vector<8x128xf32>
    %c0_16 = arith.constant 0 : index
    %c0_17 = arith.constant 0 : index
    %35 = vector.load %arg7[%c0_16, %c0_17] : memref<8x128xf32, #tpu.memory_space<vmem>>, vector<8x128xf32>
    tpu.vector_store %arg7[%c0_16, %c0_17], %34 {strides = array<i32>} : memref<8x128xf32, #tpu.memory_space<vmem>>, vector<8x128xf32>,
    %c0_18 = arith.constant 0 : index
    %c0_19 = arith.constant 0 : index
    %36 = vector.load %arg8[%c0_18, %c0_19] : memref<8x128xf32, #tpu.memory_space<vmem>>, vector<8x128xf32>
    %37 = arith.addf %36, %29 : vector<8x128xf32>
    %c0_20 = arith.constant 0 : index
    %c0_21 = arith.constant 0 : index
    %38 = vector.load %arg8[%c0_20, %c0_21] : memref<8x128xf32, #tpu.memory_space<vmem>>, vector<8x128xf32>
    tpu.vector_store %arg8[%c0_20, %c0_21], %37 {strides = array<i32>} : memref<8x128xf32, #tpu.memory_space<vmem>>, vector<8x128xf32>,
    %c0_i32_22 = arith.constant 0 : i32
    %39 = arith.cmpi eq, %arg2, %c0_i32_22 : i32
    %40 = arith.extui %39 : i1 to i32
    %c0_i32_23 = arith.constant 0 : i32
    %41 = arith.cmpi ne, %40, %c0_i32_23 : i32
    scf.if %41 {
      %c0_24 = arith.constant 0 : index
      %c0_25 = arith.constant 0 : index
      %42 = vector.load %arg6[%c0_24, %c0_25] : memref<8x128xf32, #tpu.memory_space<vmem>>, vector<8x128xf32>
      %c0_26 = arith.constant 0 : index
      %c0_27 = arith.constant 0 : index
      %c0_28 = arith.constant 0 : index
      %c0_29 = arith.constant 0 : index
      %c0_30 = arith.constant 0 : index
      %43 = vector.load %arg5[%c0_26, %c0_27, %c0_28, %c0_29, %c0_30] : memref<1x1x3x8x128xf32, #tpu.memory_space<vmem>>, vector<1x1x1x8x128xf32>
      %44 = vector.shape_cast %43 : vector<1x1x1x8x128xf32> to vector<8x128xf32>
      %45 = vector.shape_cast %42 : vector<8x128xf32> to vector<1x1x1x8x128xf32>
      tpu.vector_store %arg5[%c0_26, %c0_27, %c0_28, %c0_29, %c0_30], %45 {strides = array<i32>} : memref<1x1x3x8x128xf32, #tpu.memory_space<vmem>>, vector<1x1x1x8x128xf32>,
      %c0_31 = arith.constant 0 : index
      %c0_32 = arith.constant 0 : index
      %46 = vector.load %arg7[%c0_31, %c0_32] : memref<8x128xf32, #tpu.memory_space<vmem>>, vector<8x128xf32>
      %c0_33 = arith.constant 0 : index
      %c0_34 = arith.constant 0 : index
      %c1 = arith.constant 1 : index
      %c0_35 = arith.constant 0 : index
      %c0_36 = arith.constant 0 : index
      %47 = vector.load %arg5[%c0_33, %c0_34, %c1, %c0_35, %c0_36] : memref<1x1x3x8x128xf32, #tpu.memory_space<vmem>>, vector<1x1x1x8x128xf32>
      %48 = vector.shape_cast %47 : vector<1x1x1x8x128xf32> to vector<8x128xf32>
      %49 = vector.shape_cast %46 : vector<8x128xf32> to vector<1x1x1x8x128xf32>
      tpu.vector_store %arg5[%c0_33, %c0_34, %c1, %c0_35, %c0_36], %49 {strides = array<i32>} : memref<1x1x3x8x128xf32, #tpu.memory_space<vmem>>, vector<1x1x1x8x128xf32>,
      %c0_37 = arith.constant 0 : index
      %c0_38 = arith.constant 0 : index
      %50 = vector.load %arg8[%c0_37, %c0_38] : memref<8x128xf32, #tpu.memory_space<vmem>>, vector<8x128xf32>
      %c0_39 = arith.constant 0 : index
      %c0_40 = arith.constant 0 : index
      %c2 = arith.constant 2 : index
      %c0_41 = arith.constant 0 : index
      %c0_42 = arith.constant 0 : index
      %51 = vector.load %arg5[%c0_39, %c0_40, %c2, %c0_41, %c0_42] : memref<1x1x3x8x128xf32, #tpu.memory_space<vmem>>, vector<1x1x1x8x128xf32>
      %52 = vector.shape_cast %51 : vector<1x1x1x8x128xf32> to vector<8x128xf32>
      %53 = vector.shape_cast %50 : vector<8x128xf32> to vector<1x1x1x8x128xf32>
      tpu.vector_store %arg5[%c0_39, %c0_40, %c2, %c0_41, %c0_42], %53 {strides = array<i32>} : memref<1x1x3x8x128xf32, #tpu.memory_space<vmem>>, vector<1x1x1x8x128xf32>,
    } else {
    }
    return
  }
  func.func @transform_0(%arg0: i32, %arg1: i32, %arg2: i32) -> (i32, i32, i32) {
    %c1_i32 = arith.constant 1 : i32
    %0 = arith.muli %arg1, %c1_i32 : i32
    %1 = arith.addi %0, %arg2 : i32
    %c0_i32 = arith.constant 0 : i32
    %c0_i32_0 = arith.constant 0 : i32
    return %arg0, %1, %c0_i32 : i32, i32, i32
  }
  func.func @transform_1(%arg0: i32, %arg1: i32, %arg2: i32) -> (i32, i32, i32) {
    %c1_i32 = arith.constant 1 : i32
    %0 = arith.muli %arg1, %c1_i32 : i32
    %1 = arith.addi %0, %arg2 : i32
    %c0_i32 = arith.constant 0 : i32
    %c0_i32_0 = arith.constant 0 : i32
    return %arg0, %1, %c0_i32 : i32, i32, i32
  }
  func.func @transform_2(%arg0: i32, %arg1: i32, %arg2: i32) -> (i32, i32, i32, i32, i32) {
    %c0_i32 = arith.constant 0 : i32
    %c0_i32_0 = arith.constant 0 : i32
    %c0_i32_1 = arith.constant 0 : i32
    %c0_i32_2 = arith.constant 0 : i32
    return %arg0, %arg1, %c0_i32, %c0_i32_0, %c0_i32_1 : i32, i32, i32, i32, i32
  }
}

</mosaic_0001>

<llo_original>
// kernel: tpu_custom_call.1
$region0: #{tpu_custom_call.1}
  #allocation0 [shape = 'u32[]', space=smem, size = 0x4, offset = 0x4, fixed_abs, tag = 'smem constant byte address 0x4 - core index']
  #allocation1 [shape = 'u32[144,128]{1,0:T(1,128)}', space=vmem, size = 0x12000, scoped, tag = 'internal scratch']
  #allocation2 [shape = 'f32[8,128]{1,0:T(8,128)}', space=vmem, size = 0x1000, scoped, tag = 'scratch operand']
  #allocation3 [shape = 'f32[8,128]{1,0:T(8,128)}', space=vmem, size = 0x1000, scoped, tag = 'scratch operand']
  #allocation4 [shape = 'f32[8,128]{1,0:T(8,128)}', space=vmem, size = 0x1000, scoped, tag = 'scratch operand']
  %s0 = inlined_call_operand.hbm [shape: f32[2,8,128], index: 0, kind: input, shape index: {}]
  %s1 = inlined_call_operand.hbm [shape: f32[2,8,128], index: 1, kind: input, shape index: {}]
  %s2 = inlined_call_operand.hbm [shape: f32[2,1,3,8,128], index: 2, kind: output, shape index: {}]
  %s3 = sld [smem:[#allocation0]]
  $region57: #{tpu_custom_call.1} parent=0
    _
  %s5 = ssub.s32 1, %s3
  %s6 = scalar_select 0, %s5, %s3
  $region1: #{tpu_custom_call.1} parent=0
    #allocation5 [shape = 'u8[8192]{0}', space=vmem, size = 0x2000, scoped, tag = 'input window, operand 0']
    #allocation6 [shape = 's32[2]{0}', space=sflag, size = 0x8, scoped, tag = 'scoped memory for tpu_custom_call.1']
    #allocation7 [shape = 's32[2]{0}', space=sflag, size = 0x8, scoped, tag = 'scoped memory for tpu_custom_call.1']
    #allocation8 [shape = 'u8[8192]{0}', space=vmem, size = 0x2000, scoped, tag = 'input window, operand 1']
    #allocation9 [shape = 's32[2]{0}', space=sflag, size = 0x8, scoped, tag = 'scoped memory for tpu_custom_call.1']
    #allocation10 [shape = 'u8[24576]{0}', space=vmem, size = 0x6000, scoped, tag = 'output window, operand 0']
    %7 = vsyncpa [#allocation6], 0
    %s8 = scalar_lea.sflag [#allocation6], 1
    %9 = vsyncpa %s8, 0
    %10 = vsyncpa [#allocation9], 0
    %s11 = scalar_lea.sflag [#allocation9], 1
    %12 = vsyncpa %s11, 0
    %13 = vsyncpa [#allocation7], 0
    %s14 = scalar_lea.sflag [#allocation7], 1
    %15 = vsyncpa %s14, 0
    loop: start=0, step=1, limit=4
    $region2: #{tpu_custom_call.1} parent=1 // loop_pre_header
      _
    $region3: #{tpu_custom_call.1} parent=1 // loop_header
      %s17 = sphi 0, %s21
      %p18 = scmp.ge.s32.totalorder %s17, 4
      %s24 = sphi 0, %s43
      %s25 = sphi 0, %s39
      %s26 = sphi 0, %s35
      %s27 = sphi 0, %s24
      %s28 = sphi 0, %s25
      %s29 = sphi 0, %s26
      %s30 = sphi 0, %s27
      %s31 = sphi 0, %s28
      %s32 = sphi 0, %s29
      %s50 = sphi 0, %s52
      %s53 = sphi 0, %s50
      %s54 = sphi 0, %s53
      %s70 = sphi 0, %s54
      %s80 = sphi 0, %s82
      %s83 = sphi 0, %s80
      %s84 = sphi 0, %s83
      %s100 = sphi 0, %s84
      %s108 = sphi 0, %s110
      %s111 = sphi 0, %s108
      %s112 = sphi 0, %s111
      %s128 = sphi 0, %s112
    $region4: #{tpu_custom_call.1} parent=1 // loop_header_branch
      %20 = sbr.rel (%p18) target = $region8
    $region5: #{tpu_custom_call.1} parent=1 // loop_body
      %s22 = ssub.s32 %s17, 1
      %s23 = ssub.s32 %s17, 2
      %s33 = sadd.s32 1, %s26
      %p34 = scmp.ge.s32.totalorder %s33, 1
      %s35 = scalar_select %p34, 0, %s33
      %s36 = sadd.s32 1, %s25
      %s37 = scalar_select %p34, %s36, %s25
      %p38 = scmp.ge.s32.totalorder %s37, 1
      %s39 = scalar_select %p38, 0, %s37
      %s40 = sadd.s32 1, %s24
      %s41 = scalar_select %p38, %s40, %s24
      %p42 = scmp.ge.s32.totalorder %s41, 2
      %s43 = scalar_select %p42, 0, %s41
      %s44 = sadd.s32 %s25, %s26
      %s45 = sadd.s32 %s39, %s35
      %s46 = ssub.s32 %s24, %s43
      %s47 = ssub.s32 %s44, %s45
      %s48 = sor.u32 %s46, %s47
      %p49 = scmp.eq.s32.totalorder %s48, 0
      %s51 = sadd.s32 %s50, 1
      %s52 = scalar_select %p49, %s50, %s51
      %p55 = pneg %p49
      %p56 = scmp.eq.s32.totalorder %s17, 1
      %p57 = por %p55, %p56
      %p58 = scmp.ne.s32.totalorder %s50, %s53
      %p59 = scmp.eq.s32.totalorder %s17, 0
      %p60 = por %p58, %p59
      %p61 = scmp.ne.s32.totalorder %s50, %s53
      %p62 = scmp.eq.s32.totalorder %s22, 1
      %p63 = por %p61, %p62
      %p64 = scmp.ne.s32.totalorder %s53, %s54
      %p65 = scmp.eq.s32.totalorder %s22, 0
      %p66 = por %p64, %p65
      %p67 = scmp.ne.s32.totalorder %s53, %s54
      %p68 = scmp.eq.s32.totalorder %s23, 1
      %p69 = por %p67, %p68
      %p71 = scmp.ne.s32.totalorder %s54, %s70
      %p72 = scmp.eq.s32.totalorder %s23, 0
      %p73 = por %p71, %p72
      %s74 = sadd.s32 %s25, %s26
      %s75 = sadd.s32 %s39, %s35
      %s76 = ssub.s32 %s24, %s43
      %s77 = ssub.s32 %s74, %s75
      %s78 = sor.u32 %s76, %s77
      %p79 = scmp.eq.s32.totalorder %s78, 0
      %s81 = sadd.s32 %s80, 1
      %s82 = scalar_select %p79, %s80, %s81
      %p85 = pneg %p79
      %p86 = scmp.eq.s32.totalorder %s17, 1
      %p87 = por %p85, %p86
      %p88 = scmp.ne.s32.totalorder %s80, %s83
      %p89 = scmp.eq.s32.totalorder %s17, 0
      %p90 = por %p88, %p89
      %p91 = scmp.ne.s32.totalorder %s80, %s83
      %p92 = scmp.eq.s32.totalorder %s22, 1
      %p93 = por %p91, %p92
      %p94 = scmp.ne.s32.totalorder %s83, %s84
      %p95 = scmp.eq.s32.totalorder %s22, 0
      %p96 = por %p94, %p95
      %p97 = scmp.ne.s32.totalorder %s83, %s84
      %p98 = scmp.eq.s32.totalorder %s23, 1
      %p99 = por %p97, %p98
      %p101 = scmp.ne.s32.totalorder %s84, %s100
      %p102 = scmp.eq.s32.totalorder %s23, 0
      %p103 = por %p101, %p102
      %s104 = ssub.s32 %s24, %s43
      %s105 = ssub.s32 %s25, %s39
      %s106 = sor.u32 %s104, %s105
      %p107 = scmp.eq.s32.totalorder %s106, 0
      %s109 = sadd.s32 %s108, 1
      %s110 = scalar_select %p107, %s108, %s109
      %p113 = pneg %p107
      %p114 = scmp.eq.s32.totalorder %s17, 1
      %p115 = por %p113, %p114
      %p116 = scmp.ne.s32.totalorder %s108, %s111
      %p117 = scmp.eq.s32.totalorder %s17, 0
      %p118 = por %p116, %p117
      %p119 = scmp.ne.s32.totalorder %s108, %s111
      %p120 = scmp.eq.s32.totalorder %s22, 1
      %p121 = por %p119, %p120
      %p122 = scmp.ne.s32.totalorder %s111, %s112
      %p123 = scmp.eq.s32.totalorder %s22, 0
      %p124 = por %p122, %p123
      %p125 = scmp.ne.s32.totalorder %s111, %s112
      %p126 = scmp.eq.s32.totalorder %s23, 1
      %p127 = por %p125, %p126
      %p129 = scmp.ne.s32.totalorder %s112, %s128
      %p130 = scmp.eq.s32.totalorder %s23, 0
      %p131 = por %p129, %p130
      %p132 = scmp.le.s32.totalorder 1, %s17
      %p133 = scmp.lt.s32.totalorder %s17, 3
      %p134 = pnand %p132, %p133
      %p135 = pneg %p134
      // Predicated region
      $region9: #{tpu_custom_call.1} parent=5 // pred_check
        _
      $region10: #{tpu_custom_call.1} parent=5 // pred_check_branch
        %137 = sbr.rel (%p134) target = $region12
      $region11: #{tpu_custom_call.1} parent=5 // pred_region
        %s138 = ssub.s32 %s17, 1
      $region12: #{tpu_custom_call.1} parent=5 // pred_fallthru
        _
      %p139 = scmp.lt.s32.totalorder %s17, 2
      // Predicated region
      $region13: #{tpu_custom_call.1} parent=5 // pred_check
        %p140 = pneg %p139
      $region14: #{tpu_custom_call.1} parent=5 // pred_check_branch
        %142 = sbr.rel (%p140) target = $region16
      $region15: #{tpu_custom_call.1} parent=5 // pred_region
        // Predicated region
        $region17: #{tpu_custom_call.1} parent=15 // pred_check
          %p143 = pneg %p60
        $region18: #{tpu_custom_call.1} parent=15 // pred_check_branch
          %145 = sbr.rel (%p143) target = $region20
        $region19: #{tpu_custom_call.1} parent=15 // pred_region
          %s146 = sand.u32 %s50, 1
          %s147 = scalar_lea.sflag [#allocation6], %s146
          %s148 = sand.u32 %s50, 1
          %s149 = smul.addr %s148, 8
          %s150 = scalar_lea.vmem [#allocation5], %s149
          %s151 = sadd.s32 %s25, %s26
          %s153 = ssub.s32 128, 128
          %154 = vsyncadd %s147, %s153
          %s155 = sadd.s32 %s151, %s24
          %s156 = smul.addr %s155, 128
          %s157 = scalar_lea.hbm %s0, %s156
          %s159 = sshll.u32 %s150, 4
          %s160 = int_to_ptr.vmem [resolvable:$true] %s159
          %162 = dma.hbm_to_vmem [thread:$0]  %s157, 128, %s160, %s147
        $region20: #{tpu_custom_call.1} parent=15 // pred_fallthru
          _
        // Predicated region
        $region21: #{tpu_custom_call.1} parent=15 // pred_check
          %p163 = pneg %p90
        $region22: #{tpu_custom_call.1} parent=15 // pred_check_branch
          %165 = sbr.rel (%p163) target = $region24
        $region23: #{tpu_custom_call.1} parent=15 // pred_region
          %s166 = sand.u32 %s80, 1
          %s167 = scalar_lea.sflag [#allocation9], %s166
          %s168 = sand.u32 %s80, 1
          %s169 = smul.addr %s168, 8
          %s170 = scalar_lea.vmem [#allocation8], %s169
          %s171 = sadd.s32 %s25, %s26
          %s173 = ssub.s32 128, 128
          %174 = vsyncadd %s167, %s173
          %s175 = sadd.s32 %s171, %s24
          %s176 = smul.addr %s175, 128
          %s177 = scalar_lea.hbm %s1, %s176
          %s179 = sshll.u32 %s170, 4
          %s180 = int_to_ptr.vmem [resolvable:$true] %s179
          %182 = dma.hbm_to_vmem [thread:$0]  %s177, 128, %s180, %s167
        $region24: #{tpu_custom_call.1} parent=15 // pred_fallthru
          _
      $region16: #{tpu_custom_call.1} parent=5 // pred_fallthru
        _
      %p183 = scmp.le.s32.totalorder 1, %s17
      %p184 = scmp.lt.s32.totalorder %s17, 3
      %p185 = pnand %p183, %p184
      %p186 = pneg %p185
      // Predicated region
      $region25: #{tpu_custom_call.1} parent=5 // pred_check
        _
      $region26: #{tpu_custom_call.1} parent=5 // pred_check_branch
        %188 = sbr.rel (%p185) target = $region28
      $region27: #{tpu_custom_call.1} parent=5 // pred_region
        %s189 = ssub.s32 %s17, 1
        %s190 = sand.u32 %s53, 1
        %s191 = scalar_lea.sflag [#allocation6], %s190
        %s192 = sand.u32 %s53, 1
        %s193 = smul.addr %s192, 8
        %s194 = scalar_lea.vmem [#allocation5], %s193
        // Predicated region
        $region29: #{tpu_custom_call.1} parent=27 // pred_check
          %p195 = pneg %p66
        $region30: #{tpu_custom_call.1} parent=27 // pred_check_branch
          %197 = sbr.rel (%p195) target = $region32
        $region31: #{tpu_custom_call.1} parent=27 // pred_region
          %198 = dma.done %s191, 128
        $region32: #{tpu_custom_call.1} parent=27 // pred_fallthru
          _
        %s199 = sand.u32 %s83, 1
        %s200 = scalar_lea.sflag [#allocation9], %s199
        %s201 = sand.u32 %s83, 1
        %s202 = smul.addr %s201, 8
        %s203 = scalar_lea.vmem [#allocation8], %s202
        // Predicated region
        $region33: #{tpu_custom_call.1} parent=27 // pred_check
          %p204 = pneg %p96
        $region34: #{tpu_custom_call.1} parent=27 // pred_check_branch
          %206 = sbr.rel (%p204) target = $region36
        $region35: #{tpu_custom_call.1} parent=27 // pred_region
          %207 = dma.done %s200, 128
        $region36: #{tpu_custom_call.1} parent=27 // pred_fallthru
          _
        %s208 = sand.u32 %s53, 1
        %s209 = scalar_lea.sflag [#allocation6], %s208
        %s210 = sand.u32 %s53, 1
        %s211 = smul.addr %s210, 8
        %s212 = scalar_lea.vmem [#allocation5], %s211
        %p213 = pneg %p66
        %p214 = pneg %p63
        %s215 = sand.u32 %s83, 1
        %s216 = scalar_lea.sflag [#allocation9], %s215
        %s217 = sand.u32 %s83, 1
        %s218 = smul.addr %s217, 8
        %s219 = scalar_lea.vmem [#allocation8], %s218
        %p220 = pneg %p96
        %p221 = pneg %p93
        %p222 = pneg %p124
        %p223 = pneg %p121
        %s224 = sand.u32 %s111, 1
        %s225 = scalar_lea.sflag [#allocation7], %s224
        %s226 = sand.u32 %s111, 1
        %s227 = smul.addr %s226, 24
        %s228 = scalar_lea.vmem [#allocation10], %s227
        %s229 = sadd.s32 %s28, %s29
        %s230 = sadd.s32 %s28, %s29
        %p231 = scmp.eq.s32.totalorder %s29, 0
        // Predicated region
        $region37: #{tpu_custom_call.1} parent=27 // pred_check
          %p232 = pneg %p231
        $region38: #{tpu_custom_call.1} parent=27 // pred_check_branch
          %234 = sbr.rel (%p232) target = $region40
        $region39: #{tpu_custom_call.1} parent=27 // pred_region
          %235 = vst [vmem:[#allocation2] sm:$0xff] 0.0
          %236 = vst [vmem:[#allocation3] sm:$0xff] 0.0
          %237 = vst [vmem:[#allocation4] sm:$0xff] 0.0
        $region40: #{tpu_custom_call.1} parent=27 // pred_fallthru
          _
        %v238 = vld [vmem:[%s194] sm:$0xff]
        %v239 = vld [vmem:[%s203] sm:$0xff]
        %v240 = vand.u32 2147483647, %v238
        %v241 = vsub.f32 0.0, %v240
        %v242 = vmul.f32 %v241, 1.442695
        %v243 = vpow.pop %v242
        %v244 = vadd.f32 %v243, 1.0
        %v245 = vlog2.pop %v244
        %v246 = vmul.f32 %v245, 0.6931472
        %v247 = vmul.f32 -0.5, %v243
        %v248 = vadd.f32 %v247, 1.0
        %v249 = vmul.f32 %v248, %v243
        %v250 = vand.u32 2147483647, %v243
        %vm251 = vcmp.lt.f32.partialorder %v250, 0.0004427343
        %v252 = vsel %vm251, %v249, %v246
        %v253 = vadd.f32 %v243, 1.0
        %v254 = vrcp.pop %v253
        %v255 = vmul.f32 %v253, %v254
        %v256 = vsub.f32 2.0, %v255
        %v257 = vmul.f32 %v254, %v256
        %vm258 = vcmp.ge.f32.partialorder %v238, 0.0
        %v259 = vmul.f32 %v243, %v257
        %v260 = vsel %vm258, %v257, %v259
        %v261 = vmax.f32 %v238, 0.0
        %v262 = vmul.f32 %v238, %v239
        %v263 = vsub.f32 %v261, %v262
        %v264 = vadd.f32 %v263, %v252
        %v265 = vadd.f32 %v260, %v239
        %v266 = vmul.f32 %v260, %v239
        %v267 = vld [vmem:[#allocation2] sm:$0xff]
        %v268 = vadd.f32 %v267, %v264
        %269 = vst [vmem:[#allocation2] sm:$0xff] %v268
        %v270 = vld [vmem:[#allocation3] sm:$0xff]
        %v271 = vadd.f32 %v270, %v265
        %272 = vst [vmem:[#allocation3] sm:$0xff] %v271
        %v273 = vld [vmem:[#allocation4] sm:$0xff]
        %v274 = vadd.f32 %v273, %v266
        %275 = vst [vmem:[#allocation4] sm:$0xff] %v274
        // Predicated region
        $region41: #{tpu_custom_call.1} parent=27 // pred_check
          %p276 = pneg %p231
        $region42: #{tpu_custom_call.1} parent=27 // pred_check_branch
          %278 = sbr.rel (%p276) target = $region44
        $region43: #{tpu_custom_call.1} parent=27 // pred_region
          %v279 = vld [vmem:[#allocation2] sm:$0xff]
          %280 = vst [vmem:[%s228] sm:$0xff] %v279
          %v281 = vld [vmem:[#allocation3] sm:$0xff]
          %s282 = scalar_lea.vmem %s228, 8 [#allocation10]
          %283 = vst [vmem:[%s282] sm:$0xff] %v281
          %v284 = vld [vmem:[#allocation4] sm:$0xff]
          %s285 = scalar_lea.vmem %s228, 16 [#allocation10]
          %286 = vst [vmem:[%s285] sm:$0xff] %v284
        $region44: #{tpu_custom_call.1} parent=27 // pred_fallthru
          _
        %s287 = sand.u32 %s111, 1
        %s288 = scalar_lea.sflag [#allocation7], %s287
        %s289 = sand.u32 %s111, 1
        %s290 = smul.addr %s289, 24
        %s291 = scalar_lea.vmem [#allocation10], %s290
        // Predicated region
        $region45: #{tpu_custom_call.1} parent=27 // pred_check
          %p292 = pneg %p121
        $region46: #{tpu_custom_call.1} parent=27 // pred_check_branch
          %294 = sbr.rel (%p292) target = $region48
        $region47: #{tpu_custom_call.1} parent=27 // pred_region
          %s296 = ssub.s32 384, 384
          %297 = vsyncadd %s288, %s296
          %s298 = smul.addr %s28, 3
          %s299 = smul.addr %s27, 3
          %s300 = sadd.s32 %s298, %s299
          %s301 = smul.addr %s300, 128
          %s302 = scalar_lea.hbm %s2, %s301
          %s303 = sshll.u32 %s291, 4
          %s304 = int_to_ptr.vmem [resolvable:$true] %s303
          %309 = dma.vmem_to_hbm [thread:$0]  %s304, 384, %s302, %s288, 128, 128, 8
        $region48: #{tpu_custom_call.1} parent=27 // pred_fallthru
          _
      $region28: #{tpu_custom_call.1} parent=5 // pred_fallthru
        _
      %p310 = scmp.le.s32.totalorder 2, %s17
      // Predicated region
      $region49: #{tpu_custom_call.1} parent=5 // pred_check
        %p311 = pneg %p310
      $region50: #{tpu_custom_call.1} parent=5 // pred_check_branch
        %313 = sbr.rel (%p311) target = $region52
      $region51: #{tpu_custom_call.1} parent=5 // pred_region
        %s314 = ssub.s32 %s17, 2
        // Predicated region
        $region53: #{tpu_custom_call.1} parent=51 // pred_check
          %p315 = pneg %p127
        $region54: #{tpu_custom_call.1} parent=51 // pred_check_branch
          %317 = sbr.rel (%p315) target = $region56
        $region55: #{tpu_custom_call.1} parent=51 // pred_region
          %s318 = sand.u32 %s112, 1
          %s319 = scalar_lea.sflag [#allocation7], %s318
          %s320 = sand.u32 %s112, 1
          %s321 = smul.addr %s320, 24
          %s322 = scalar_lea.vmem [#allocation10], %s321
          %323 = dma.done %s319, 384
        $region56: #{tpu_custom_call.1} parent=51 // pred_fallthru
          _
      $region52: #{tpu_custom_call.1} parent=5 // pred_fallthru
        _
    $region6: #{tpu_custom_call.1} parent=1 // loop_footer
      %s21 = sadd.s32 1, %s17
    $region7: #{tpu_custom_call.1} parent=1 // loop_footer_branch
      %16 = sbr.rel target = $region3
    $region8: #{tpu_custom_call.1} parent=1 // loop_exit
      _
    %324 = vsyncpa [#allocation6], 1
    %s325 = scalar_lea.sflag [#allocation6], 1
    %326 = vsyncpa %s325, 1
    %327 = vsyncpa [#allocation9], 1
    %s328 = scalar_lea.sflag [#allocation9], 1
    %329 = vsyncpa %s328, 1
    %330 = vsyncpa [#allocation7], 1
    %s331 = scalar_lea.sflag [#allocation7], 1
    %332 = vsyncpa %s331, 1

</llo_original>
